<compile_context>
chip_gen: v6e
topology: v6e:2x2x1
jax: 0.10.0
libtpu: 0.0.40
codegen_flags: <defaults>
</compile_context>

<pallas_src>
import jax
import jax.numpy as jnp
from jax.experimental import pallas as pl
from jax.experimental.pallas import tpu as pltpu

EDGE_LENGTH = 3
NUM_SQUARES = 6 * EDGE_LENGTH * EDGE_LENGTH          # 54
NUM_STATES = 6 * NUM_SQUARES                         # 324
NUM_OUTPUTS = 6 * 2 + 4 * (EDGE_LENGTH - 2)          # 16
HIDDEN2 = 2 * NUM_OUTPUTS                            # 32

# Lane-aligned (128-wide) padded feature widths for each layer's output.
H1_PAD = 128    # 54 -> 128
H2_PAD = 128    # 32 -> 128
OUT_PAD = 128   # 16 -> 128 (lane-dense store; wrapper slices [:, :16])

# Batch tile: multiple of 16 (bf16 sublane packing), big enough to amortize per-step
# pipeline overhead, small enough to fit v7x's 32 MiB scoped-VMEM default with headroom.
TILE_B_MAX = 1024

# SELU constants (match torch.nn.SELU)
_SELU_ALPHA = 1.6732632423543772848170429916717
_SELU_SCALE = 1.0507009873554804934193349852946


def _selu(x):
    return _SELU_SCALE * jnp.where(x > 0, x, _SELU_ALPHA * (jnp.exp(x) - 1.0))


def _round_up(n, m):
    return ((n + m - 1) // m) * m


def dqn_kernel(x_ref, w1_ref, b1_ref, w2_ref, b2_ref, w3_ref, b3_ref, out_ref):
    # Layer 1: (TB, 324)bf16 @ (324, 128)bf16 -> f32 accumulate; bias + SELU in f32.
    h = jnp.dot(x_ref[...], w1_ref[...], preferred_element_type=jnp.float32)
    h = _selu(h + b1_ref[...])
    # Layer 2: (TB, 128) @ (128, 128); padded rows/cols are zero so math is unchanged.
    h = jnp.dot(h.astype(w2_ref.dtype), w2_ref[...], preferred_element_type=jnp.float32)
    h = _selu(h + b2_ref[...])
    # Layer 3: lane-dense (TB, 128) output; real Q-values live in columns [:16].
    h = jnp.dot(h.astype(w3_ref.dtype), w3_ref[...], preferred_element_type=jnp.float32)
    out_ref[...] = (h + b3_ref[...]).astype(out_ref.dtype)


def prepare_params(params_f32, compute_dtype=jnp.bfloat16):
    """Zero-pad feature dims to 128 lanes; weights -> MXU dtype, biases stay f32."""
    w1, b1, w2, b2, w3, b3 = params_f32

    def pad2(a, rows, cols):
        return jnp.zeros((rows, cols), a.dtype).at[: a.shape[0], : a.shape[1]].set(a)

    return (
        pad2(w1, NUM_STATES, H1_PAD).astype(compute_dtype),
        pad2(b1, 1, H1_PAD),
        pad2(w2, H1_PAD, H2_PAD).astype(compute_dtype),
        pad2(b2, 1, H2_PAD),
        pad2(w3, H2_PAD, OUT_PAD).astype(compute_dtype),
        pad2(b3, 1, OUT_PAD),
    )


def dqn_forward(x, padded_params, compute_dtype=jnp.bfloat16):
    w1, b1, w2, b2, w3, b3 = padded_params
    B = x.shape[0]

    tile_b = min(TILE_B_MAX, _round_up(max(B, 1), 16))
    b_pad = _round_up(B, tile_b)

    x_p = x.astype(compute_dtype)
    if b_pad != B:
        x_p = jnp.pad(x_p, ((0, b_pad - B), (0, 0)))

    const = lambda i: (0, 0)
    out = pl.pallas_call(
        dqn_kernel,
        out_shape=jax.ShapeDtypeStruct((b_pad, OUT_PAD), jnp.float32),
        grid=(b_pad // tile_b,),
        in_specs=[
            # x: pipelined over the batch grid axis.
            pl.BlockSpec((tile_b, NUM_STATES), lambda i: (i, 0)),
            # Weights / biases: constant block index -> DMA'd once, stay resident.
            pl.BlockSpec((NUM_STATES, H1_PAD), const),
            pl.BlockSpec((1, H1_PAD), const),
            pl.BlockSpec((H1_PAD, H2_PAD), const),
            pl.BlockSpec((1, H2_PAD), const),
            pl.BlockSpec((H2_PAD, OUT_PAD), const),
            pl.BlockSpec((1, OUT_PAD), const),
        ],
        out_specs=pl.BlockSpec((tile_b, OUT_PAD), lambda i: (i, 0)),
        compiler_params=pltpu.CompilerParams(dimension_semantics=("parallel",)),
    )(x_p, w1, b1, w2, b2, w3, b3)

    # Drop batch padding and the lane padding of the output.
    return out[:B, :NUM_OUTPUTS]


def init_params(key):
    """Deterministic init mimicking PyTorch Linear default (uniform +-1/sqrt(fan_in))."""
    dims = [(NUM_STATES, NUM_SQUARES), (NUM_SQUARES, HIDDEN2), (HIDDEN2, NUM_OUTPUTS)]
    params = []
    for fan_in, fan_out in dims:
        key, kw, kb = jax.random.split(key, 3)
        bound = 1.0 / jnp.sqrt(fan_in)
        w = jax.random.uniform(kw, (fan_in, fan_out), jnp.float32, -bound, bound)
        b = jax.random.uniform(kb, (1, fan_out), jnp.float32, -bound, bound)
        params += [w, b]
    return tuple(params)


def dqn_reference_f32(x, params_f32):
    """Pure-JAX full-f32 reference (matches the PyTorch module semantics)."""
    w1, b1, w2, b2, w3, b3 = params_f32
    h = _selu(x @ w1 + b1)
    h = _selu(h @ w2 + b2)
    return h @ w3 + b3


def dqn_reference_mixed(x, params_f32, compute_dtype=jnp.bfloat16):
    """Pure-JAX reference using the same bf16-matmul / f32-accumulate path as the kernel."""
    w1, b1, w2, b2, w3, b3 = params_f32
    d = compute_dtype
    h = _selu(jnp.dot(x.astype(d), w1.astype(d), preferred_element_type=jnp.float32) + b1)
    h = _selu(jnp.dot(h.astype(d), w2.astype(d), preferred_element_type=jnp.float32) + b2)
    return jnp.dot(h.astype(d), w3.astype(d), preferred_element_type=jnp.float32) + b3


if __name__ == "__main__":
    key = jax.random.PRNGKey(0)
    key, kx, kx2 = jax.random.split(key, 3)

    params = init_params(key)
    padded_params = prepare_params(params)

    # Small "online inference" batch.
    batch = 2
    x = jax.random.normal(kx, (batch, NUM_STATES), dtype=jnp.float32)
    out = jax.block_until_ready(dqn_forward(x, padded_params))
    assert out.shape == (batch, NUM_OUTPUTS), out.shape
    assert jnp.allclose(out, dqn_reference_mixed(x, params), atol=1e-3, rtol=1e-3), \
        "mismatch vs bf16-matmul reference (small batch)"
    assert jnp.allclose(out, dqn_reference_f32(x, params), atol=5e-2, rtol=5e-2), \
        "mismatch vs f32 reference (small batch)"

    # Larger "replay-buffer" batch that exercises the batch grid + tail padding.
    big_batch = 2050
    xb = jax.random.normal(kx2, (big_batch, NUM_STATES), dtype=jnp.float32)
    outb = jax.block_until_ready(dqn_forward(xb, padded_params))
    assert outb.shape == (big_batch, NUM_OUTPUTS), outb.shape
    assert jnp.allclose(outb, dqn_reference_mixed(xb, params), atol=1e-3, rtol=1e-3), \
        "mismatch vs bf16-matmul reference (large batch)"
    assert jnp.allclose(outb, dqn_reference_f32(xb, params), atol=5e-2, rtol=5e-2), \
        "mismatch vs f32 reference (large batch)"

    print("KERNEL_OK")
</pallas_src>

<mosaic_0001>
module attributes {stable_mosaic.version = 11 : i64} {
  func.func @dqn_kernel(%arg0: i32, %arg1: memref<16x324xbf16, #tpu.memory_space<vmem>>, %arg2: memref<324x128xbf16, #tpu.memory_space<vmem>>, %arg3: memref<1x128xf32, #tpu.memory_space<vmem>>, %arg4: memref<128x128xbf16, #tpu.memory_space<vmem>>, %arg5: memref<1x128xf32, #tpu.memory_space<vmem>>, %arg6: memref<128x128xbf16, #tpu.memory_space<vmem>>, %arg7: memref<1x128xf32, #tpu.memory_space<vmem>>, %arg8: memref<16x128xf32, #tpu.memory_space<vmem>>) attributes {dimension_semantics = [#tpu.dimension_semantics<parallel>], iteration_bounds = array<i64: 1>, scalar_prefetch = 0 : i64, scratch_operands = 0 : i64, tpu.core_type = #tpu.core_type<tc>, window_params = [{transform_indices = @transform_0, window_bounds = array<i64: 16, 324>}, {pipeline_mode = #tpu.pipeline_mode<synchronous>, transform_indices = @transform_1, window_bounds = array<i64: 324, 128>}, {pipeline_mode = #tpu.pipeline_mode<synchronous>, transform_indices = @transform_2, window_bounds = array<i64: 1, 128>}, {pipeline_mode = #tpu.pipeline_mode<synchronous>, transform_indices = @transform_3, window_bounds = array<i64: 128, 128>}, {pipeline_mode = #tpu.pipeline_mode<synchronous>, transform_indices = @transform_4, window_bounds = array<i64: 1, 128>}, {pipeline_mode = #tpu.pipeline_mode<synchronous>, transform_indices = @transform_5, window_bounds = array<i64: 128, 128>}, {pipeline_mode = #tpu.pipeline_mode<synchronous>, transform_indices = @transform_6, window_bounds = array<i64: 1, 128>}, {transform_indices = @transform_7, window_bounds = array<i64: 16, 128>}]} {
    %c0 = arith.constant 0 : index
    %c0_0 = arith.constant 0 : index
    %0 = vector.load %arg1[%c0, %c0_0] : memref<16x324xbf16, #tpu.memory_space<vmem>>, vector<16x324xbf16>
    %c0_1 = arith.constant 0 : index
    %c0_2 = arith.constant 0 : index
    %1 = vector.load %arg2[%c0_1, %c0_2] : memref<324x128xbf16, #tpu.memory_space<vmem>>, vector<324x128xbf16>
    %cst = arith.constant dense<0.000000e+00> : vector<16x128xf32>
    %2 = tpu.matmul %0, %1, %cst {dimension_numbers = #tpu.dot_dimension_numbers<[1], [0], [0], [1], [0, 0, 1, 1], [], []>} : vector<16x324xbf16>, vector<324x128xbf16>, vector<16x128xf32> -> vector<16x128xf32>
    %c0_3 = arith.constant 0 : index
    %c0_4 = arith.constant 0 : index
    %3 = vector.load %arg3[%c0_3, %c0_4] : memref<1x128xf32, #tpu.memory_space<vmem>>, vector<1x128xf32>
    %4 = vector.broadcast %3 : vector<1x128xf32> to vector<16x128xf32>
    %5 = arith.addf %2, %4 : vector<16x128xf32>
    %cst_5 = arith.constant 0.000000e+00 : f32
    %6 = vector.broadcast %cst_5 : f32 to vector<16x128xf32>
    %7 = arith.cmpf ogt, %5, %6 : vector<16x128xf32>
    %8 = math.exp %5 : vector<16x128xf32>
    %cst_6 = arith.constant 1.000000e+00 : f32
    %9 = vector.broadcast %cst_6 : f32 to vector<16x128xf32>
    %10 = arith.subf %8, %9 : vector<16x128xf32>
    %cst_7 = arith.constant 1.67326319 : f32
    %11 = vector.broadcast %cst_7 : f32 to vector<16x128xf32>
    %12 = arith.mulf %11, %10 : vector<16x128xf32>
    %13 = arith.select %7, %5, %12 : vector<16x128xi1>, vector<16x128xf32>
    %cst_8 = arith.constant 1.05070102 : f32
    %14 = vector.broadcast %cst_8 : f32 to vector<16x128xf32>
    %15 = arith.mulf %14, %13 : vector<16x128xf32>
    %16 = arith.truncf %15 : vector<16x128xf32> to vector<16x128xbf16>
    %c0_9 = arith.constant 0 : index
    %c0_10 = arith.constant 0 : index
    %17 = vector.load %arg4[%c0_9, %c0_10] : memref<128x128xbf16, #tpu.memory_space<vmem>>, vector<128x128xbf16>
    %cst_11 = arith.constant dense<0.000000e+00> : vector<16x128xf32>
    %18 = tpu.matmul %16, %17, %cst_11 {dimension_numbers = #tpu.dot_dimension_numbers<[1], [0], [0], [1], [0, 0, 1, 1], [], []>} : vector<16x128xbf16>, vector<128x128xbf16>, vector<16x128xf32> -> vector<16x128xf32>
    %c0_12 = arith.constant 0 : index
    %c0_13 = arith.constant 0 : index
    %19 = vector.load %arg5[%c0_12, %c0_13] : memref<1x128xf32, #tpu.memory_space<vmem>>, vector<1x128xf32>
    %20 = vector.broadcast %19 : vector<1x128xf32> to vector<16x128xf32>
    %21 = arith.addf %18, %20 : vector<16x128xf32>
    %cst_14 = arith.constant 0.000000e+00 : f32
    %22 = vector.broadcast %cst_14 : f32 to vector<16x128xf32>
    %23 = arith.cmpf ogt, %21, %22 : vector<16x128xf32>
    %24 = math.exp %21 : vector<16x128xf32>
    %cst_15 = arith.constant 1.000000e+00 : f32
    %25 = vector.broadcast %cst_15 : f32 to vector<16x128xf32>
    %26 = arith.subf %24, %25 : vector<16x128xf32>
    %cst_16 = arith.constant 1.67326319 : f32
    %27 = vector.broadcast %cst_16 : f32 to vector<16x128xf32>
    %28 = arith.mulf %27, %26 : vector<16x128xf32>
    %29 = arith.select %23, %21, %28 : vector<16x128xi1>, vector<16x128xf32>
    %cst_17 = arith.constant 1.05070102 : f32
    %30 = vector.broadcast %cst_17 : f32 to vector<16x128xf32>
    %31 = arith.mulf %30, %29 : vector<16x128xf32>
    %32 = arith.truncf %31 : vector<16x128xf32> to vector<16x128xbf16>
    %c0_18 = arith.constant 0 : index
    %c0_19 = arith.constant 0 : index
    %33 = vector.load %arg6[%c0_18, %c0_19] : memref<128x128xbf16, #tpu.memory_space<vmem>>, vector<128x128xbf16>
    %cst_20 = arith.constant dense<0.000000e+00> : vector<16x128xf32>
    %34 = tpu.matmul %32, %33, %cst_20 {dimension_numbers = #tpu.dot_dimension_numbers<[1], [0], [0], [1], [0, 0, 1, 1], [], []>} : vector<16x128xbf16>, vector<128x128xbf16>, vector<16x128xf32> -> vector<16x128xf32>
    %c0_21 = arith.constant 0 : index
    %c0_22 = arith.constant 0 : index
    %35 = vector.load %arg7[%c0_21, %c0_22] : memref<1x128xf32, #tpu.memory_space<vmem>>, vector<1x128xf32>
    %36 = vector.broadcast %35 : vector<1x128xf32> to vector<16x128xf32>
    %37 = arith.addf %34, %36 : vector<16x128xf32>
    %c0_23 = arith.constant 0 : index
    %c0_24 = arith.constant 0 : index
    %38 = vector.load %arg8[%c0_23, %c0_24] : memref<16x128xf32, #tpu.memory_space<vmem>>, vector<16x128xf32>
    tpu.vector_store %arg8[%c0_23, %c0_24], %37 {strides = array<i32>} : memref<16x128xf32, #tpu.memory_space<vmem>>, vector<16x128xf32>,
    return
  }
  func.func @transform_0(%arg0: i32) -> (i32, i32) {
    %c0_i32 = arith.constant 0 : i32
    %c0_i32_0 = arith.constant 0 : i32
    return %arg0, %c0_i32 : i32, i32
  }
  func.func @transform_1(%arg0: i32) -> (i32, i32) {
    %c0_i32 = arith.constant 0 : i32
    %c0_i32_0 = arith.constant 0 : i32
    %c0_i32_1 = arith.constant 0 : i32
    return %c0_i32, %c0_i32_0 : i32, i32
  }
  func.func @transform_2(%arg0: i32) -> (i32, i32) {
    %c0_i32 = arith.constant 0 : i32
    %c0_i32_0 = arith.constant 0 : i32
    %c0_i32_1 = arith.constant 0 : i32
    return %c0_i32, %c0_i32_0 : i32, i32
  }
  func.func @transform_3(%arg0: i32) -> (i32, i32) {
    %c0_i32 = arith.constant 0 : i32
    %c0_i32_0 = arith.constant 0 : i32
    %c0_i32_1 = arith.constant 0 : i32
    return %c0_i32, %c0_i32_0 : i32, i32
  }
  func.func @transform_4(%arg0: i32) -> (i32, i32) {
    %c0_i32 = arith.constant 0 : i32
    %c0_i32_0 = arith.constant 0 : i32
    %c0_i32_1 = arith.constant 0 : i32
    return %c0_i32, %c0_i32_0 : i32, i32
  }
  func.func @transform_5(%arg0: i32) -> (i32, i32) {
    %c0_i32 = arith.constant 0 : i32
    %c0_i32_0 = arith.constant 0 : i32
    %c0_i32_1 = arith.constant 0 : i32
    return %c0_i32, %c0_i32_0 : i32, i32
  }
  func.func @transform_6(%arg0: i32) -> (i32, i32) {
    %c0_i32 = arith.constant 0 : i32
    %c0_i32_0 = arith.constant 0 : i32
    %c0_i32_1 = arith.constant 0 : i32
    return %c0_i32, %c0_i32_0 : i32, i32
  }
  func.func @transform_7(%arg0: i32) -> (i32, i32) {
    %c0_i32 = arith.constant 0 : i32
    %c0_i32_0 = arith.constant 0 : i32
    return %arg0, %c0_i32 : i32, i32
  }
}

</mosaic_0001>

<llo_original>
// kernel: tpu_custom_call.1
$region0: #{tpu_custom_call.1}
  #allocation0 [shape = 'u32[]', space=smem, size = 0x4, offset = 0x4, fixed_abs, tag = 'smem constant byte address 0x4 - core index']
  #allocation1 [shape = 'u32[144,128]{1,0:T(1,128)}', space=vmem, size = 0x12000, scoped, tag = 'internal scratch']
  %s0 = inlined_call_operand.hbm [shape: bf16[16,324], index: 0, kind: input, shape index: {}]
  %s1 = inlined_call_operand.hbm [shape: bf16[324,128], index: 1, kind: input, shape index: {}]
  %s2 = inlined_call_operand.vmem [shape: f32[1,128], index: 2, kind: input, shape index: {}]
  %s3 = inlined_call_operand.hbm [shape: bf16[128,128], index: 3, kind: input, shape index: {}]
  %s4 = inlined_call_operand.vmem [shape: f32[1,128], index: 4, kind: input, shape index: {}]
  %s5 = inlined_call_operand.hbm [shape: bf16[128,128], index: 5, kind: input, shape index: {}]
  %s6 = inlined_call_operand.vmem [shape: f32[1,128], index: 6, kind: input, shape index: {}]
  %s7 = inlined_call_operand.hbm [shape: f32[16,128], index: 7, kind: output, shape index: {}]
  %s8 = sld [smem:[#allocation0]]
  $region54: #{tpu_custom_call.1} parent=0
    _
  %s10 = ssub.s32 1, %s8
  %s11 = scalar_select 0, %s10, %s8
  $region1: #{tpu_custom_call.1} parent=0
    #allocation2 [shape = 'u8[12288]{0}', space=vmem, size = 0x3000, scoped, tag = 'input window, operand 0, single buffered']
    #allocation3 [shape = 's32[1]{0}', space=sflag, size = 0x4, scoped, tag = 'scoped memory for tpu_custom_call.1']
    #allocation4 [shape = 's32[1]{0}', space=sflag, size = 0x4, scoped, tag = 'scoped memory for tpu_custom_call.1']
    #allocation5 [shape = 'u8[83968]{0}', space=vmem, size = 0x14800, scoped, tag = 'input window, operand 1, single buffered']
    #allocation6 [shape = 's32[1]{0}', space=sflag, size = 0x4, scoped, tag = 'scoped memory for tpu_custom_call.1']
    #allocation7 [shape = 'u8[32768]{0}', space=vmem, size = 0x8000, scoped, tag = 'input window, operand 3, single buffered']
    #allocation8 [shape = 'u8[32768]{0}', space=vmem, size = 0x8000, scoped, tag = 'input window, operand 5, single buffered']
    #allocation9 [shape = 's32[1]{0}', space=sflag, size = 0x4, scoped, tag = 'scoped memory for tpu_custom_call.1']
    #allocation10 [shape = 'u8[8192]{0}', space=vmem, size = 0x2000, scoped, tag = 'output window, operand 0, single buffered']
    %12 = vsyncpa [#allocation3], 0
    %13 = vsyncpa [#allocation6], 0
    %14 = vsyncpa [#allocation9], 0
    %15 = vsyncpa [#allocation4], 0
    // Predicated region
    $region2: #{tpu_custom_call.1} parent=1 // pred_check
      _
    $region3: #{tpu_custom_call.1} parent=1 // pred_check_branch
      %17 = sbr.rel (0) target = $region5
    $region4: #{tpu_custom_call.1} parent=1 // pred_region
      %s19 = ssub.s32 384, 384
      %20 = vsyncadd [#allocation3], %s19
      %s21 = sshll.u32 [#allocation2], 4
      %s22 = int_to_ptr.vmem [resolvable:$true] %s21
      %27 = dma.hbm_to_vmem [thread:$0]  %s0, 384, %s22, [#allocation3], 192, 192, 12
    $region5: #{tpu_custom_call.1} parent=1 // pred_fallthru
      _
    // Predicated region
    $region6: #{tpu_custom_call.1} parent=1 // pred_check
      _
    $region7: #{tpu_custom_call.1} parent=1 // pred_check_branch
      %29 = sbr.rel (0) target = $region9
    $region8: #{tpu_custom_call.1} parent=1 // pred_region
      %s31 = ssub.s32 2624, 2624
      %32 = vsyncadd [#allocation6], %s31
      %s33 = sshll.u32 [#allocation5], 4
      %s34 = int_to_ptr.vmem [resolvable:$true] %s33
      %39 = dma.hbm_to_vmem [thread:$0]  %s1, 2624, %s34, [#allocation6], 64, 64, 4
    $region9: #{tpu_custom_call.1} parent=1 // pred_fallthru
      _
    // Predicated region
    $region10: #{tpu_custom_call.1} parent=1 // pred_check
      _
    $region11: #{tpu_custom_call.1} parent=1 // pred_check_branch
      %41 = sbr.rel (0) target = $region13
    $region12: #{tpu_custom_call.1} parent=1 // pred_region
      _
    $region13: #{tpu_custom_call.1} parent=1 // pred_fallthru
      _
    // Predicated region
    $region14: #{tpu_custom_call.1} parent=1 // pred_check
      _
    $region15: #{tpu_custom_call.1} parent=1 // pred_check_branch
      %43 = sbr.rel (0) target = $region17
    $region16: #{tpu_custom_call.1} parent=1 // pred_region
      %s45 = ssub.s32 1024, 1024
      %46 = vsyncadd [#allocation6], %s45
      %s47 = sshll.u32 [#allocation7], 4
      %s48 = int_to_ptr.vmem [resolvable:$true] %s47
      %53 = dma.hbm_to_vmem [thread:$0]  %s3, 1024, %s48, [#allocation6], 64, 64, 4
    $region17: #{tpu_custom_call.1} parent=1 // pred_fallthru
      _
    // Predicated region
    $region18: #{tpu_custom_call.1} parent=1 // pred_check
      _
    $region19: #{tpu_custom_call.1} parent=1 // pred_check_branch
      %55 = sbr.rel (0) target = $region21
    $region20: #{tpu_custom_call.1} parent=1 // pred_region
      _
    $region21: #{tpu_custom_call.1} parent=1 // pred_fallthru
      _
    // Predicated region
    $region22: #{tpu_custom_call.1} parent=1 // pred_check
      _
    $region23: #{tpu_custom_call.1} parent=1 // pred_check_branch
      %57 = sbr.rel (0) target = $region25
    $region24: #{tpu_custom_call.1} parent=1 // pred_region
      %s59 = ssub.s32 1024, 1024
      %60 = vsyncadd [#allocation9], %s59
      %s61 = sshll.u32 [#allocation8], 4
      %s62 = int_to_ptr.vmem [resolvable:$true] %s61
      %67 = dma.hbm_to_vmem [thread:$0]  %s5, 1024, %s62, [#allocation9], 64, 64, 4
    $region25: #{tpu_custom_call.1} parent=1 // pred_fallthru
      _
    // Predicated region
    $region26: #{tpu_custom_call.1} parent=1 // pred_check
      _
    $region27: #{tpu_custom_call.1} parent=1 // pred_check_branch
      %69 = sbr.rel (0) target = $region29
    $region28: #{tpu_custom_call.1} parent=1 // pred_region
      _
    $region29: #{tpu_custom_call.1} parent=1 // pred_fallthru
      _
    // Predicated region
    $region30: #{tpu_custom_call.1} parent=1 // pred_check
      _
    $region31: #{tpu_custom_call.1} parent=1 // pred_check_branch
      %71 = sbr.rel (0) target = $region33
    $region32: #{tpu_custom_call.1} parent=1 // pred_region
      %72 = dma.done [#allocation3], 384
    $region33: #{tpu_custom_call.1} parent=1 // pred_fallthru
      _
    // Predicated region
    $region34: #{tpu_custom_call.1} parent=1 // pred_check
      _
    $region35: #{tpu_custom_call.1} parent=1 // pred_check_branch
      %74 = sbr.rel (0) target = $region37
    $region36: #{tpu_custom_call.1} parent=1 // pred_region
      %75 = dma.done [#allocation6], 2624
    $region37: #{tpu_custom_call.1} parent=1 // pred_fallthru
      _
    // Predicated region
    $region38: #{tpu_custom_call.1} parent=1 // pred_check
      _
    $region39: #{tpu_custom_call.1} parent=1 // pred_check_branch
      %77 = sbr.rel (0) target = $region41
    $region40: #{tpu_custom_call.1} parent=1 // pred_region
      %78 = dma.done [#allocation6], 1024
    $region41: #{tpu_custom_call.1} parent=1 // pred_fallthru
      _
    // Predicated region
    $region42: #{tpu_custom_call.1} parent=1 // pred_check
      _
    $region43: #{tpu_custom_call.1} parent=1 // pred_check_branch
      %80 = sbr.rel (0) target = $region45
    $region44: #{tpu_custom_call.1} parent=1 // pred_region
      %81 = dma.done [#allocation9], 1024
    $region45: #{tpu_custom_call.1} parent=1 // pred_fallthru
      _
    %v83 = vld [vmem:[#allocation2] sm:$0xff]
    %v84 = vld [vmem:[#allocation2 + $0x8] sm:$0xf]
    %v85 = vld [vmem:[#allocation2 + $0xc] sm:$0xff]
    %v86 = vld [vmem:[#allocation2 + $0x14] sm:$0xf]
    %v87 = vld [vmem:[#allocation5] sm:$0xf]
    %v88 = vld [vmem:[#allocation5 + $0x4] sm:$0xf]
    %v89 = vld [vmem:[#allocation5 + $0x8] sm:$0xf]
    %v90 = vld [vmem:[#allocation5 + $0xc] sm:$0xf]
    %v91 = vld [vmem:[#allocation5 + $0x10] sm:$0xf]
    %v92 = vld [vmem:[#allocation5 + $0x14] sm:$0xf]
    %v93 = vld [vmem:[#allocation5 + $0x18] sm:$0xf]
    %v94 = vld [vmem:[#allocation5 + $0x1c] sm:$0xf]
    %v95 = vld [vmem:[#allocation5 + $0x20] sm:$0xf]
    %v96 = vld [vmem:[#allocation5 + $0x24] sm:$0xf]
    %v97 = vld [vmem:[#allocation5 + $0x28] sm:$0xf]
    %v98 = vld [vmem:[#allocation5 + $0x2c] sm:$0xf]
    %v99 = vld [vmem:[#allocation5 + $0x30] sm:$0xf]
    %v100 = vld [vmem:[#allocation5 + $0x34] sm:$0xf]
    %v101 = vld [vmem:[#allocation5 + $0x38] sm:$0xf]
    %v102 = vld [vmem:[#allocation5 + $0x3c] sm:$0xf]
    %v103 = vld [vmem:[#allocation5 + $0x40] sm:$0xf]
    %v104 = vld [vmem:[#allocation5 + $0x44] sm:$0xf]
    %v105 = vld [vmem:[#allocation5 + $0x48] sm:$0xf]
    %v106 = vld [vmem:[#allocation5 + $0x4c] sm:$0xf]
    %v107 = vld [vmem:[#allocation5 + $0x50] sm:$0xf]
    %v108 = vld [vmem:[#allocation5 + $0x54] sm:$0xf]
    %v109 = vld [vmem:[#allocation5 + $0x58] sm:$0xf]
    %v110 = vld [vmem:[#allocation5 + $0x5c] sm:$0xf]
    %v111 = vld [vmem:[#allocation5 + $0x60] sm:$0xf]
    %v112 = vld [vmem:[#allocation5 + $0x64] sm:$0xf]
    %v113 = vld [vmem:[#allocation5 + $0x68] sm:$0xf]
    %v114 = vld [vmem:[#allocation5 + $0x6c] sm:$0xf]
    %v115 = vld [vmem:[#allocation5 + $0x70] sm:$0xf]
    %v116 = vld [vmem:[#allocation5 + $0x74] sm:$0xf]
    %v117 = vld [vmem:[#allocation5 + $0x78] sm:$0xf]
    %v118 = vld [vmem:[#allocation5 + $0x7c] sm:$0xf]
    %v119 = vld [vmem:[#allocation5 + $0x80] sm:$0xf]
    %v120 = vld [vmem:[#allocation5 + $0x84] sm:$0xf]
    %v121 = vld [vmem:[#allocation5 + $0x88] sm:$0xf]
    %v122 = vld [vmem:[#allocation5 + $0x8c] sm:$0xf]
    %v123 = vld [vmem:[#allocation5 + $0x90] sm:$0xf]
    %v124 = vld [vmem:[#allocation5 + $0x94] sm:$0xf]
    %v125 = vld [vmem:[#allocation5 + $0x98] sm:$0xf]
    %v126 = vld [vmem:[#allocation5 + $0x9c] sm:$0xf]
    %v127 = vld [vmem:[#allocation5 + $0xa0] sm:$0x3]
    %v128 = vld [vmem:[%s2] sm:$0x1]
    %v130 = vlaneseq
    %v131 = vshrl.u32 %v130, 7
    %v132 = vsub.s32 0, %v131
    %v133 = vrot.slane %v128, %v132
    %v139 = vunpack.c.l.b16 %v83
    %v140 = vunpack.c.h.b16 %v83
    %v141 = vunpack.c.l.b16 %v84
    %v142 = vunpack.c.l.b16 %v85
    %v143 = vunpack.c.h.b16 %v85
    %v144 = vunpack.c.l.b16 %v86
    %v145 = vpack.c.b16 %v142, %v139
    %v146 = vpack.c.b16 %v143, %v140
    %v147 = vpack.c.b16 %v144, %v141
    %v191 = vunpack.c.l.b16 %v87
    %v192 = vunpack.c.l.b16 %v88
    %v193 = vunpack.c.l.b16 %v89
    %v194 = vunpack.c.l.b16 %v90
    %v195 = vunpack.c.l.b16 %v91
    %v196 = vunpack.c.l.b16 %v92
    %v197 = vunpack.c.l.b16 %v93
    %v198 = vunpack.c.l.b16 %v94
    %v199 = vunpack.c.l.b16 %v95
    %v200 = vunpack.c.l.b16 %v96
    %v201 = vunpack.c.l.b16 %v97
    %v202 = vunpack.c.l.b16 %v98
    %v203 = vunpack.c.l.b16 %v99
    %v204 = vunpack.c.l.b16 %v100
    %v205 = vunpack.c.l.b16 %v101
    %v206 = vunpack.c.l.b16 %v102
    %v207 = vunpack.c.l.b16 %v103
    %v208 = vunpack.c.l.b16 %v104
    %v209 = vunpack.c.l.b16 %v105
    %v210 = vunpack.c.l.b16 %v106
    %v211 = vunpack.c.l.b16 %v107
    %v212 = vunpack.c.l.b16 %v108
    %v213 = vunpack.c.l.b16 %v109
    %v214 = vunpack.c.l.b16 %v110
    %v215 = vunpack.c.l.b16 %v111
    %v216 = vunpack.c.l.b16 %v112
    %v217 = vunpack.c.l.b16 %v113
    %v218 = vunpack.c.l.b16 %v114
    %v219 = vunpack.c.l.b16 %v115
    %v220 = vunpack.c.l.b16 %v116
    %v221 = vunpack.c.l.b16 %v117
    %v222 = vunpack.c.l.b16 %v118
    %v223 = vunpack.c.l.b16 %v119
    %v224 = vunpack.c.l.b16 %v120
    %v225 = vunpack.c.l.b16 %v121
    %v226 = vunpack.c.l.b16 %v122
    %v227 = vunpack.c.l.b16 %v123
    %v228 = vunpack.c.l.b16 %v124
    %v229 = vunpack.c.l.b16 %v125
    %v230 = vunpack.c.l.b16 %v126
    %v231 = vunpack.c.l.b16 %v127
    %v232 = vpack.c.b16 %v192, %v191
    %v233 = vpack.c.b16 %v194, %v193
    %v234 = vpack.c.b16 %v196, %v195
    %v235 = vpack.c.b16 %v198, %v197
    %v236 = vpack.c.b16 %v200, %v199
    %v237 = vpack.c.b16 %v202, %v201
    %v238 = vpack.c.b16 %v204, %v203
    %v239 = vpack.c.b16 %v206, %v205
    %v240 = vpack.c.b16 %v208, %v207
    %v241 = vpack.c.b16 %v210, %v209
    %v242 = vpack.c.b16 %v212, %v211
    %v243 = vpack.c.b16 %v214, %v213
    %v244 = vpack.c.b16 %v216, %v215
    %v245 = vpack.c.b16 %v218, %v217
    %v246 = vpack.c.b16 %v220, %v219
    %v247 = vpack.c.b16 %v222, %v221
    %v248 = vpack.c.b16 %v224, %v223
    %v249 = vpack.c.b16 %v226, %v225
    %v250 = vpack.c.b16 %v228, %v227
    %v251 = vpack.c.b16 %v230, %v229
    %v252 = vpack.c.b16 %v231, %v231
    %vm273 = vcmask 556032
    %v275 = vsel %vm273, %v147, 0
    %vm277 = vcmask 1041408
    %v279 = vsel %vm277, %v252, 0
    %281 = vmatprep.subr.bf16.mxu0 0
    %282 = vmatpush1.bf16.msra.mxu0 %v239
    %283 = vmatprep.subr.bf16.mxu0 0
    %284 = vmatpush1.bf16.msra.mxu0 %v238
    %285 = vmatprep.subr.bf16.mxu0 0
    %286 = vmatpush1.bf16.msra.mxu0 %v237
    %287 = vmatprep.subr.bf16.mxu0 0
    %288 = vmatpush1.bf16.msra.mxu0 %v236
    %289 = vmatprep.subr.bf16.mxu0 0
    %290 = vmatpush1.bf16.msra.mxu0 %v235
    %291 = vmatprep.subr.bf16.mxu0 0
    %292 = vmatpush1.bf16.msra.mxu0 %v234
    %293 = vmatprep.subr.bf16.mxu0 0
    %294 = vmatpush1.bf16.msra.mxu0 %v233
    %295 = vmatprep.subr.bf16.mxu0 0
    %296 = vmatpush1.bf16.msra.mxu0 %v232
    %297 = vmatprep.subr.bf16.mxu0 0
    %298 = vmatpush2.bf16.msra.mxu0 %v247
    %299 = vmatprep.subr.bf16.mxu0 0
    %300 = vmatpush2.bf16.msra.mxu0 %v246
    %301 = vmatprep.subr.bf16.mxu0 0
    %302 = vmatpush2.bf16.msra.mxu0 %v245
    %303 = vmatprep.subr.bf16.mxu0 0
    %304 = vmatpush2.bf16.msra.mxu0 %v244
    %305 = vmatprep.subr.bf16.mxu0 0
    %306 = vmatpush2.bf16.msra.mxu0 %v243
    %307 = vmatprep.subr.bf16.mxu0 0
    %308 = vmatpush2.bf16.msra.mxu0 %v242
    %309 = vmatprep.subr.bf16.mxu0 0
    %310 = vmatpush2.bf16.msra.mxu0 %v241
    %311 = vmatprep.subr.bf16.mxu0 0
    %312 = vmatpush2.bf16.msra.mxu0 %v240
    %313 = vmatprep.mubr.bf16.mxu0 %v146
    %314 = vmatmul.mubr.bf16.gmra.mxu0 %v145
    %v315 = vpop.f32.mrf.mxu0
    %v316 = vadd.f32 %v133, %v315
    %v317 = vpop.f32.mrf.mxu0
    %v318 = vpop.f32.mrf.mxu0
    %v319 = vadd.f32 %v133, %v318
    %v320 = vpop.f32.mrf.mxu0
    %321 = vdwg.mxu0
    %322 = vmatprep.subr.bf16.mxu0 0
    %323 = vmatpush1.bf16.msra.mxu0 0
    %324 = vmatprep.subr.bf16.mxu0 0
    %325 = vmatpush1.bf16.msra.mxu0 0
    %326 = vmatprep.subr.bf16.mxu0 0
    %327 = vmatpush1.bf16.msra.mxu0 0
    %328 = vmatprep.subr.bf16.mxu0 0
    %329 = vmatpush1.bf16.msra.mxu0 %v279
    %330 = vmatprep.subr.bf16.mxu0 0
    %331 = vmatpush1.bf16.msra.mxu0 %v251
    %332 = vmatprep.subr.bf16.mxu0 0
    %333 = vmatpush1.bf16.msra.mxu0 %v250
    %334 = vmatprep.subr.bf16.mxu0 0
    %335 = vmatpush1.bf16.msra.mxu0 %v249
    %336 = vmatprep.subr.bf16.mxu0 0
    %337 = vmatpush1.bf16.msra.mxu0 %v248
    %338 = vmatprep.subr.bf16.mxu0 0
    %339 = vmatpush2.bf16.msra.mxu0 0
    %340 = vmatprep.subr.bf16.mxu0 0
    %341 = vmatpush2.bf16.msra.mxu0 0
    %342 = vmatprep.subr.bf16.mxu0 0
    %343 = vmatpush2.bf16.msra.mxu0 0
    %344 = vmatprep.subr.bf16.mxu0 0
    %345 = vmatpush2.bf16.msra.mxu0 0
    %346 = vmatprep.subr.bf16.mxu0 0
    %347 = vmatpush2.bf16.msra.mxu0 0
    %348 = vmatprep.subr.bf16.mxu0 0
    %349 = vmatpush2.bf16.msra.mxu0 0
    %350 = vmatprep.subr.bf16.mxu0 0
    %351 = vmatpush2.bf16.msra.mxu0 0
    %352 = vmatprep.subr.bf16.mxu0 0
    %353 = vmatpush2.bf16.msra.mxu0 0
    %354 = vmatprep.mubr.bf16.mxu0 0
    %355 = vmatmul.mubr.bf16.gmra.mxu0 %v275
    %v356 = vpop.f32.mrf.mxu0
    %v357 = vadd.f32 %v316, %v356
    %v358 = vpop.f32.mrf.mxu0
    %v359 = vpop.f32.mrf.mxu0
    %v360 = vadd.f32 %v319, %v359
    %v361 = vpop.f32.mrf.mxu0
    %362 = vdwg.mxu0
    %vm363 = vcmp.gt.f32.partialorder %v357, 0.0
    %vm364 = vcmp.gt.f32.partialorder %v360, 0.0
    %v365 = vmul.f32 %v357, 1.442695
    %v366 = vpow.pop %v365
    %v367 = vmul.f32 %v360, 1.442695
    %v368 = vpow.pop %v367
    %v369 = vsub.f32 %v366, 1.0
    %v370 = vsub.f32 %v368, 1.0
    %v371 = vmul.f32 %v369, 1.6732632
    %v372 = vmul.f32 %v370, 1.6732632
    %v373 = vsel %vm363, %v357, %v371
    %v374 = vsel %vm364, %v360, %v372
    %v375 = vmul.f32 %v373, 1.050701
    %v376 = vmul.f32 %v374, 1.050701
    %v377 = vpack.c.bf16 %v376, %v375
    %v378 = vld [vmem:[#allocation7] sm:$0xf]
    %v379 = vld [vmem:[#allocation7 + $0x4] sm:$0xf]
    %v380 = vld [vmem:[#allocation7 + $0x8] sm:$0xf]
    %v381 = vld [vmem:[#allocation7 + $0xc] sm:$0xf]
    %v382 = vld [vmem:[#allocation7 + $0x10] sm:$0xf]
    %v383 = vld [vmem:[#allocation7 + $0x14] sm:$0xf]
    %v384 = vld [vmem:[#allocation7 + $0x18] sm:$0xf]
    %v385 = vld [vmem:[#allocation7 + $0x1c] sm:$0xf]
    %v386 = vld [vmem:[#allocation7 + $0x20] sm:$0xf]
    %v387 = vld [vmem:[#allocation7 + $0x24] sm:$0xf]
    %v388 = vld [vmem:[#allocation7 + $0x28] sm:$0xf]
    %v389 = vld [vmem:[#allocation7 + $0x2c] sm:$0xf]
    %v390 = vld [vmem:[#allocation7 + $0x30] sm:$0xf]
    %v391 = vld [vmem:[#allocation7 + $0x34] sm:$0xf]
    %v392 = vld [vmem:[#allocation7 + $0x38] sm:$0xf]
    %v393 = vld [vmem:[#allocation7 + $0x3c] sm:$0xf]
    %v394 = vld [vmem:[%s4] sm:$0x1]
    %v396 = vlaneseq
    %v397 = vshrl.u32 %v396, 7
    %v398 = vsub.s32 0, %v397
    %v399 = vrot.slane %v394, %v398
    %v417 = vunpack.c.l.b16 %v378
    %v418 = vunpack.c.l.b16 %v379
    %v419 = vunpack.c.l.b16 %v380
    %v420 = vunpack.c.l.b16 %v381
    %v421 = vunpack.c.l.b16 %v382
    %v422 = vunpack.c.l.b16 %v383
    %v423 = vunpack.c.l.b16 %v384
    %v424 = vunpack.c.l.b16 %v385
    %v425 = vunpack.c.l.b16 %v386
    %v426 = vunpack.c.l.b16 %v387
    %v427 = vunpack.c.l.b16 %v388
    %v428 = vunpack.c.l.b16 %v389
    %v429 = vunpack.c.l.b16 %v390
    %v430 = vunpack.c.l.b16 %v391
    %v431 = vunpack.c.l.b16 %v392
    %v432 = vunpack.c.l.b16 %v393
    %v433 = vpack.c.b16 %v418, %v417
    %v434 = vpack.c.b16 %v420, %v419
    %v435 = vpack.c.b16 %v422, %v421
    %v436 = vpack.c.b16 %v424, %v423
    %v437 = vpack.c.b16 %v426, %v425
    %v438 = vpack.c.b16 %v428, %v427
    %v439 = vpack.c.b16 %v430, %v429
    %v440 = vpack.c.b16 %v432, %v431
    %449 = vmatprep.subr.bf16.mxu0 0
    %450 = vmatpush1.bf16.msra.mxu0 %v440
    %451 = vmatprep.subr.bf16.mxu0 0
    %452 = vmatpush1.bf16.msra.mxu0 %v439
    %453 = vmatprep.subr.bf16.mxu0 0
    %454 = vmatpush1.bf16.msra.mxu0 %v438
    %455 = vmatprep.subr.bf16.mxu0 0
    %456 = vmatpush1.bf16.msra.mxu0 %v437
    %457 = vmatprep.subr.bf16.mxu0 0
    %458 = vmatpush1.bf16.msra.mxu0 %v436
    %459 = vmatprep.subr.bf16.mxu0 0
    %460 = vmatpush1.bf16.msra.mxu0 %v435
    %461 = vmatprep.subr.bf16.mxu0 0
    %462 = vmatpush1.bf16.msra.mxu0 %v434
    %463 = vmatprep.subr.bf16.mxu0 0
    %464 = vmatpush1.bf16.msra.mxu0 %v433
    %465 = vmatprep.subr.bf16.mxu0 0
    %466 = vmatpush2.bf16.msra.mxu0 0
    %467 = vmatprep.subr.bf16.mxu0 0
    %468 = vmatpush2.bf16.msra.mxu0 0
    %469 = vmatprep.subr.bf16.mxu0 0
    %470 = vmatpush2.bf16.msra.mxu0 0
    %471 = vmatprep.subr.bf16.mxu0 0
    %472 = vmatpush2.bf16.msra.mxu0 0
    %473 = vmatprep.subr.bf16.mxu0 0
    %474 = vmatpush2.bf16.msra.mxu0 0
    %475 = vmatprep.subr.bf16.mxu0 0
    %476 = vmatpush2.bf16.msra.mxu0 0
    %477 = vmatprep.subr.bf16.mxu0 0
    %478 = vmatpush2.bf16.msra.mxu0 0
    %479 = vmatprep.subr.bf16.mxu0 0
    %480 = vmatpush2.bf16.msra.mxu0 0
    %481 = vmatprep.mubr.bf16.mxu0 0
    %482 = vmatmul.mubr.bf16.gmra.mxu0 %v377
    %v483 = vpop.f32.mrf.mxu0
    %v484 = vadd.f32 %v399, %v483
    %v485 = vpop.f32.mrf.mxu0
    %v486 = vpop.f32.mrf.mxu0
    %v487 = vadd.f32 %v399, %v486
    %v488 = vpop.f32.mrf.mxu0
    %489 = vdwg.mxu0
    %vm490 = vcmp.gt.f32.partialorder %v484, 0.0
    %vm491 = vcmp.gt.f32.partialorder %v487, 0.0
    %v492 = vmul.f32 %v484, 1.442695
    %v493 = vpow.pop %v492
    %v494 = vmul.f32 %v487, 1.442695
    %v495 = vpow.pop %v494
    %v496 = vsub.f32 %v493, 1.0
    %v497 = vsub.f32 %v495, 1.0
    %v498 = vmul.f32 %v496, 1.6732632
    %v499 = vmul.f32 %v497, 1.6732632
    %v500 = vsel %vm490, %v484, %v498
    %v501 = vsel %vm491, %v487, %v499
    %v502 = vmul.f32 %v500, 1.050701
    %v503 = vmul.f32 %v501, 1.050701
    %v504 = vpack.c.bf16 %v503, %v502
    %v505 = vld [vmem:[#allocation8] sm:$0xf]
    %v506 = vld [vmem:[#allocation8 + $0x4] sm:$0xf]
    %v507 = vld [vmem:[#allocation8 + $0x8] sm:$0xf]
    %v508 = vld [vmem:[#allocation8 + $0xc] sm:$0xf]
    %v509 = vld [vmem:[#allocation8 + $0x10] sm:$0xf]
    %v510 = vld [vmem:[#allocation8 + $0x14] sm:$0xf]
    %v511 = vld [vmem:[#allocation8 + $0x18] sm:$0xf]
    %v512 = vld [vmem:[#allocation8 + $0x1c] sm:$0xf]
    %v513 = vld [vmem:[#allocation8 + $0x20] sm:$0xf]
    %v514 = vld [vmem:[#allocation8 + $0x24] sm:$0xf]
    %v515 = vld [vmem:[#allocation8 + $0x28] sm:$0xf]
    %v516 = vld [vmem:[#allocation8 + $0x2c] sm:$0xf]
    %v517 = vld [vmem:[#allocation8 + $0x30] sm:$0xf]
    %v518 = vld [vmem:[#allocation8 + $0x34] sm:$0xf]
    %v519 = vld [vmem:[#allocation8 + $0x38] sm:$0xf]
    %v520 = vld [vmem:[#allocation8 + $0x3c] sm:$0xf]
    %v521 = vld [vmem:[%s6] sm:$0x1]
    %v523 = vlaneseq
    %v524 = vshrl.u32 %v523, 7
    %v525 = vsub.s32 0, %v524
    %v526 = vrot.slane %v521, %v525
    %v544 = vunpack.c.l.b16 %v505
    %v545 = vunpack.c.l.b16 %v506
    %v546 = vunpack.c.l.b16 %v507
    %v547 = vunpack.c.l.b16 %v508
    %v548 = vunpack.c.l.b16 %v509
    %v549 = vunpack.c.l.b16 %v510
    %v550 = vunpack.c.l.b16 %v511
    %v551 = vunpack.c.l.b16 %v512
    %v552 = vunpack.c.l.b16 %v513
    %v553 = vunpack.c.l.b16 %v514
    %v554 = vunpack.c.l.b16 %v515
    %v555 = vunpack.c.l.b16 %v516
    %v556 = vunpack.c.l.b16 %v517
    %v557 = vunpack.c.l.b16 %v518
    %v558 = vunpack.c.l.b16 %v519
    %v559 = vunpack.c.l.b16 %v520
    %v560 = vpack.c.b16 %v545, %v544
    %v561 = vpack.c.b16 %v547, %v546
    %v562 = vpack.c.b16 %v549, %v548
    %v563 = vpack.c.b16 %v551, %v550
    %v564 = vpack.c.b16 %v553, %v552
    %v565 = vpack.c.b16 %v555, %v554
    %v566 = vpack.c.b16 %v557, %v556
    %v567 = vpack.c.b16 %v559, %v558
    %576 = vmatprep.subr.bf16.mxu0 0
    %577 = vmatpush1.bf16.msra.mxu0 %v567
    %578 = vmatprep.subr.bf16.mxu0 0
    %579 = vmatpush1.bf16.msra.mxu0 %v566
    %580 = vmatprep.subr.bf16.mxu0 0
    %581 = vmatpush1.bf16.msra.mxu0 %v565
    %582 = vmatprep.subr.bf16.mxu0 0
    %583 = vmatpush1.bf16.msra.mxu0 %v564
    %584 = vmatprep.subr.bf16.mxu0 0
    %585 = vmatpush1.bf16.msra.mxu0 %v563
    %586 = vmatprep.subr.bf16.mxu0 0
    %587 = vmatpush1.bf16.msra.mxu0 %v562
    %588 = vmatprep.subr.bf16.mxu0 0
    %589 = vmatpush1.bf16.msra.mxu0 %v561
    %590 = vmatprep.subr.bf16.mxu0 0
    %591 = vmatpush1.bf16.msra.mxu0 %v560
    %592 = vmatprep.subr.bf16.mxu0 0
    %593 = vmatpush2.bf16.msra.mxu0 0
    %594 = vmatprep.subr.bf16.mxu0 0
    %595 = vmatpush2.bf16.msra.mxu0 0
    %596 = vmatprep.subr.bf16.mxu0 0
    %597 = vmatpush2.bf16.msra.mxu0 0
    %598 = vmatprep.subr.bf16.mxu0 0
    %599 = vmatpush2.bf16.msra.mxu0 0
    %600 = vmatprep.subr.bf16.mxu0 0
    %601 = vmatpush2.bf16.msra.mxu0 0
    %602 = vmatprep.subr.bf16.mxu0 0
    %603 = vmatpush2.bf16.msra.mxu0 0
    %604 = vmatprep.subr.bf16.mxu0 0
    %605 = vmatpush2.bf16.msra.mxu0 0
    %606 = vmatprep.subr.bf16.mxu0 0
    %607 = vmatpush2.bf16.msra.mxu0 0
    %608 = vmatprep.mubr.bf16.mxu0 0
    %609 = vmatmul.mubr.bf16.gmra.mxu0 %v504
    %v610 = vpop.f32.mrf.mxu0
    %v611 = vadd.f32 %v526, %v610
    %v612 = vpop.f32.mrf.mxu0
    %v613 = vpop.f32.mrf.mxu0
    %v614 = vadd.f32 %v526, %v613
    %v615 = vpop.f32.mrf.mxu0
    %616 = vdwg.mxu0
    %617 = vst [vmem:[#allocation10] sm:$0xff] %v611
    %618 = vst [vmem:[#allocation10 + $0x8] sm:$0xff] %v614
    // Predicated region
    $region46: #{tpu_custom_call.1} parent=1 // pred_check
      _
    $region47: #{tpu_custom_call.1} parent=1 // pred_check_branch
      %620 = sbr.rel (0) target = $region49
    $region48: #{tpu_custom_call.1} parent=1 // pred_region
      %s622 = ssub.s32 256, 256
      %623 = vsyncadd [#allocation4], %s622
      %s624 = sshll.u32 [#allocation10], 4
      %s625 = int_to_ptr.vmem [resolvable:$true] %s624
      %630 = dma.vmem_to_hbm [thread:$0]  %s625, 256, %s7, [#allocation4], 128, 128, 8
    $region49: #{tpu_custom_call.1} parent=1 // pred_fallthru
      _
    // Predicated region
    $region50: #{tpu_custom_call.1} parent=1 // pred_check
      _
    $region51: #{tpu_custom_call.1} parent=1 // pred_check_branch
      %632 = sbr.rel (0) target = $region53
    $region52: #{tpu_custom_call.1} parent=1 // pred_region
      %633 = dma.done [#allocation4], 256
    $region53: #{tpu_custom_call.1} parent=1 // pred_fallthru
      _
    %634 = vsyncpa [#allocation3], 1
    %635 = vsyncpa [#allocation6], 1
    %636 = vsyncpa [#allocation9], 1
    %637 = vsyncpa [#allocation4], 1

</llo_original>
